<compile_context>
chip_gen: v6e
topology: v6e:2x2x1
jax: 0.10.0
libtpu: 0.0.40
codegen_flags: <defaults>
</compile_context>

<pallas_src>
import math

import jax
import jax.numpy as jnp
from jax.experimental import pallas as pl
from jax.experimental.pallas import tpu as pltpu


# Below this many output elements, custom-call + DMA overhead dominates; use jnp.
_PALLAS_MIN_ELEMENTS = 65536
# Row-tile cap (safe across v5e / v6e / v7x together with the byte budget below).
_MAX_BLOCK_ROWS = 1024
# Target double-buffered working set (fits v5e's 16 MiB scoped default comfortably).
_VMEM_TILE_BUDGET = 12 * 1024 * 1024


def _round_up(x: int, m: int) -> int:
    return (x + m - 1) // m * m


# -----------------------------------------------------------------------------
# Pallas kernel: broadcast-sum of full / row / col / scalar inputs, / scale.
# -----------------------------------------------------------------------------
def _make_additive_kernel(n_full, n_row, n_col, has_scalar, scale, out_dtype):
    def kernel(*refs):
        i = 0
        full_refs = refs[i:i + n_full]; i += n_full
        row_refs = refs[i:i + n_row]; i += n_row
        col_refs = refs[i:i + n_col]; i += n_col
        scalar_ref = refs[i] if has_scalar else None
        i += int(has_scalar)
        out_ref = refs[i]

        if n_full:
            acc = full_refs[0][...].astype(jnp.float32)
            rest = full_refs[1:]
        else:
            acc = jnp.zeros(out_ref.shape, jnp.float32)
            rest = ()
        for r in rest:
            acc = acc + r[...].astype(jnp.float32)
        for r in row_refs:            # (BR, 1): free lane broadcast on the VPU
            acc = acc + r[...].astype(jnp.float32)
        for r in col_refs:            # (1, cols): sublane broadcast
            acc = acc + r[...].astype(jnp.float32)
        if has_scalar:                # all constant/scalar baselines pre-summed
            acc = acc + scalar_ref[0]
        if scale != 1:
            acc = acc / scale         # true division, matches torch `/`
        out_ref[...] = acc.astype(out_dtype)

    return kernel


# -----------------------------------------------------------------------------
# Wrapper: classify producers, build BlockSpecs, run one pipelined pallas_call.
# -----------------------------------------------------------------------------
def _additive_combine(outputs, scale: int) -> jnp.ndarray:
    outs = [jnp.asarray(o) for o in outputs]
    common = tuple(jnp.broadcast_shapes(*(o.shape for o in outs)))
    out_dtype = jnp.result_type(*(o.dtype for o in outs))
    if not jnp.issubdtype(out_dtype, jnp.floating):
        out_dtype = jnp.dtype(jnp.float32)   # torch `/` is true division -> float

    total = int(math.prod(common)) if common else 1

    # ---- tiny shapes: plain jnp (XLA fuses sum+scale into the producers) ----
    if total < _PALLAS_MIN_ELEMENTS:
        acc = 0
        for o in outs:
            acc = acc + o
        return (acc / scale).astype(out_dtype)

    rows = math.prod(common[:-1]) if len(common) > 1 else 1
    cols = common[-1]
    ndim = len(common)

    # ---- classify producers by native broadcast pattern ----
    scalars, fulls, rowvecs, colvecs = [], [], [], []
    for o in outs:
        shp = tuple(o.shape)
        if len(shp) == 0 or all(d == 1 for d in shp):
            scalars.append(o)
            continue
        pshp = (1,) * (ndim - len(shp)) + shp
        if pshp == common:
            fulls.append(o)
        elif pshp[:-1] == common[:-1] and pshp[-1] == 1:
            rowvecs.append(o)                      # keepdims over last axis
        elif all(d == 1 for d in pshp[:-1]) and pshp[-1] == cols:
            colvecs.append(o)                      # broadcast along rows
        else:
            # TODO(synk): irregular mid-axis broadcast pattern; materialize (rare).
            fulls.append(jnp.broadcast_to(o, common))

    # ---- lane-dense repack (only valid when every non-scalar input is full) ----
    if not rowvecs and not colvecs and (cols < 128 or ndim == 1):
        if total % 128 == 0:
            rows, cols = total // 128, 128
        else:
            rows, cols = 1, total

    fulls2d = [o.reshape(rows, cols) for o in fulls]
    rowvecs2d = [o.reshape(rows, 1) for o in rowvecs]
    colvecs2d = [o.reshape(1, cols) for o in colvecs]

    # ---- pick block rows from a double-buffered VMEM byte budget ----
    out_itemsize = jnp.dtype(out_dtype).itemsize
    per_row_bytes = (sum(cols * jnp.dtype(o.dtype).itemsize for o in fulls2d)
                     + cols * out_itemsize
                     + sum(jnp.dtype(o.dtype).itemsize for o in rowvecs2d))
    per_row_bytes = max(per_row_bytes, 1)
    br_budget = _VMEM_TILE_BUDGET // (2 * per_row_bytes)
    target = min(max(int(br_budget), 1), _MAX_BLOCK_ROWS)
    if target >= rows or rows <= 8:
        br = rows                                  # block dim == array dim is legal
    else:
        br = max(8, target - (target % 8))         # multiple-of-8 sublane tiles

    # ---- assemble inputs + BlockSpecs (native shapes, no HBM broadcast) ----
    kernel_inputs, in_specs = [], []
    for o in fulls2d:
        kernel_inputs.append(o)
        in_specs.append(pl.BlockSpec((br, cols), lambda i: (i, 0)))
    for o in rowvecs2d:
        kernel_inputs.append(o)
        in_specs.append(pl.BlockSpec((br, 1), lambda i: (i, 0)))
    for o in colvecs2d:
        kernel_inputs.append(o)
        in_specs.append(pl.BlockSpec((1, cols), lambda i: (0, 0)))

    has_scalar = bool(scalars)
    if has_scalar:
        s = jnp.zeros((), jnp.float32)
        for o in scalars:
            s = s + jnp.asarray(o, jnp.float32).reshape(())
        kernel_inputs.append(s.reshape(1))
        in_specs.append(pl.BlockSpec(memory_space=pltpu.MemorySpace.SMEM))

    kernel = _make_additive_kernel(
        len(fulls2d), len(rowvecs2d), len(colvecs2d), has_scalar, scale, out_dtype)

    out2d = pl.pallas_call(
        kernel,
        grid=(pl.cdiv(rows, br),),
        in_specs=in_specs,
        out_specs=pl.BlockSpec((br, cols), lambda i: (i, 0)),
        out_shape=jax.ShapeDtypeStruct((rows, cols), out_dtype),
        compiler_params=pltpu.CompilerParams(
            dimension_semantics=("parallel",),       # shard rows across v7x's 2 TCs
            vmem_limit_bytes=48 * 1024 * 1024,       # explicit headroom, < physical on all gens
        ),
    )(*kernel_inputs)
    return out2d.reshape(common)


# -----------------------------------------------------------------------------
# AdditiveBaseline module (JAX/Pallas port)
# -----------------------------------------------------------------------------
class AdditiveBaseline:
    """JAX/Pallas port of selfsne.baselines.AdditiveBaseline."""

    def __init__(self, baselines, mean: bool = False):
        self.baselines = list(baselines)
        self.scale = len(self.baselines) if mean else 1
        # np.log(0) -> -inf (with a warning) in the original; mirror the value.
        self.log_scale = math.log(self.scale) if self.scale > 0 else float("-inf")

    def __call__(self, pos_logits=None, neg_logits=None, context=None,
                 context_embedding=None, **kwargs) -> jnp.ndarray:
        if not self.baselines:
            return jnp.float32(0.0)
        outs = [
            b(pos_logits=pos_logits, neg_logits=neg_logits, context=context,
              context_embedding=context_embedding)
            for b in self.baselines
        ]
        return _additive_combine(outs, self.scale)


# -----------------------------------------------------------------------------
# Representative sub-baselines for the demo (plain JAX callables — the real
# sub-modules are arbitrary nn.Modules supplied by the user).
# -----------------------------------------------------------------------------
class ConstantBaseline:
    """Fixed scalar baseline; ignores all inputs."""
    def __init__(self, baseline: float = 0.0):
        self.baseline = jnp.float32(baseline)
    def __call__(self, **kwargs):
        return self.baseline


class LogMeanExpBaseline:
    """Per-row log-mean-exp over negative logits (keepdims -> (batch, 1))."""
    def __call__(self, neg_logits=None, **kwargs):
        m = jnp.max(neg_logits, axis=-1, keepdims=True)
        return m + jnp.log(jnp.mean(jnp.exp(neg_logits - m), axis=-1, keepdims=True))


class ScaledLogitsBaseline:
    """Full-shape per-(sample, negative) correction -> (batch, n_neg)."""
    def __init__(self, alpha: float = 0.1):
        self.alpha = alpha
    def __call__(self, neg_logits=None, **kwargs):
        return self.alpha * neg_logits


class PerNegativeMeanBaseline:
    """Batch-mean for each negative (keepdims on batch axis) -> (1, n_neg)."""
    def __call__(self, neg_logits=None, **kwargs):
        return jnp.mean(neg_logits, axis=0, keepdims=True)


class PosLogitsBaseline:
    """Passes the positive logits through -> (batch, 1)."""
    def __call__(self, pos_logits=None, **kwargs):
        return pos_logits


# -----------------------------------------------------------------------------
# Demo / self-check
# -----------------------------------------------------------------------------
if __name__ == "__main__":
    key = jax.random.PRNGKey(0)
    k1, k2, k3, k4, k5 = jax.random.split(key, 5)

    def reference(mods, scale, **inputs):
        acc = 0
        for b in mods:
            acc = acc + b(**inputs)
        return acc / scale

    # ---- Test 1: tiny shapes -> plain-jnp fallback path ----
    batch, n_neg, hidden = 8, 128, 32
    inputs1 = dict(
        pos_logits=jax.random.normal(k1, (batch, 1), jnp.float32),
        neg_logits=jax.random.normal(k2, (batch, n_neg), jnp.float32),
        context=jax.random.normal(k3, (batch, hidden), jnp.float32),
        context_embedding=jax.random.normal(k4, (batch, hidden), jnp.float32),
    )
    mods1 = [ConstantBaseline(0.5), LogMeanExpBaseline()]
    out = jax.block_until_ready(AdditiveBaseline(mods1, mean=False)(**inputs1))
    ref = reference(mods1, 1, **inputs1)
    assert out.shape == (batch, 1)
    assert jnp.allclose(out, ref, rtol=1e-5, atol=1e-5)
    out = jax.block_until_ready(AdditiveBaseline(mods1, mean=True)(**inputs1))
    ref = reference(mods1, 2, **inputs1)
    assert jnp.allclose(out, ref, rtol=1e-5, atol=1e-5)

    # ---- Test 2: Pallas path with mixed scalar / row / col / full producers ----
    batch2, n_neg2 = 512, 128
    inputs2 = dict(
        pos_logits=jax.random.normal(k1, (batch2, 1), jnp.float32),
        neg_logits=jax.random.normal(k2, (batch2, n_neg2), jnp.float32),
        context=None, context_embedding=None,
    )
    mods2 = [ConstantBaseline(0.5), LogMeanExpBaseline(),
             ScaledLogitsBaseline(0.1), PerNegativeMeanBaseline()]
    out = jax.block_until_ready(AdditiveBaseline(mods2, mean=True)(**inputs2))
    ref = reference(mods2, len(mods2), **inputs2)
    assert out.shape == (batch2, n_neg2) and out.dtype == jnp.float32
    assert jnp.allclose(out, ref, rtol=1e-5, atol=1e-5)
    out = jax.block_until_ready(AdditiveBaseline(mods2, mean=False)(**inputs2))
    ref = reference(mods2, 1, **inputs2)
    assert jnp.allclose(out, ref, rtol=1e-5, atol=1e-5)

    # ---- Test 3: (batch, 1) keepdims output -> lane-dense repack + multi-block grid ----
    batch3 = 163840
    inputs3 = dict(
        pos_logits=jax.random.normal(k5, (batch3, 1), jnp.float32),
        neg_logits=None, context=None, context_embedding=None,
    )
    mods3 = [ConstantBaseline(0.25), PosLogitsBaseline()]
    out = jax.block_until_ready(AdditiveBaseline(mods3, mean=True)(**inputs3))
    ref = reference(mods3, 2, **inputs3)
    assert out.shape == (batch3, 1)
    assert jnp.allclose(out, ref, rtol=1e-5, atol=1e-5)

    print("KERNEL_OK")
</pallas_src>

<mosaic_0001>
module attributes {stable_mosaic.version = 11 : i64} {
  func.func @kernel(%arg0: i32, %arg1: memref<512x128xf32, #tpu.memory_space<vmem>>, %arg2: memref<512x1xf32, #tpu.memory_space<vmem>>, %arg3: memref<1x128xf32, #tpu.memory_space<vmem>>, %arg4: memref<1xf32, #tpu.memory_space<smem>>, %arg5: memref<512x128xf32, #tpu.memory_space<vmem>>) attributes {dimension_semantics = [#tpu.dimension_semantics<parallel>], iteration_bounds = array<i64: 1>, scalar_prefetch = 0 : i64, scratch_operands = 0 : i64, tpu.core_type = #tpu.core_type<tc>, window_params = [{transform_indices = @transform_0, window_bounds = array<i64: 512, 128>}, {transform_indices = @transform_1, window_bounds = array<i64: 512, 1>}, {pipeline_mode = #tpu.pipeline_mode<synchronous>, transform_indices = @transform_2, window_bounds = array<i64: 1, 128>}, {transform_indices = @transform_3, window_bounds = array<i64: 1>}, {transform_indices = @transform_4, window_bounds = array<i64: 512, 128>}]} {
    %c0 = arith.constant 0 : index
    %c0_0 = arith.constant 0 : index
    %0 = vector.load %arg1[%c0, %c0_0] : memref<512x128xf32, #tpu.memory_space<vmem>>, vector<512x128xf32>
    %c0_1 = arith.constant 0 : index
    %c0_2 = arith.constant 0 : index
    %1 = vector.load %arg2[%c0_1, %c0_2] : memref<512x1xf32, #tpu.memory_space<vmem>>, vector<512x1xf32>
    %2 = vector.broadcast %1 : vector<512x1xf32> to vector<512x128xf32>
    %3 = arith.addf %0, %2 : vector<512x128xf32>
    %c0_3 = arith.constant 0 : index
    %c0_4 = arith.constant 0 : index
    %4 = vector.load %arg3[%c0_3, %c0_4] : memref<1x128xf32, #tpu.memory_space<vmem>>, vector<1x128xf32>
    %5 = vector.broadcast %4 : vector<1x128xf32> to vector<512x128xf32>
    %6 = arith.addf %3, %5 : vector<512x128xf32>
    %c0_5 = arith.constant 0 : index
    %7 = memref.load %arg4[%c0_5] : memref<1xf32, #tpu.memory_space<smem>>
    %8 = vector.broadcast %7 : f32 to vector<512x128xf32>
    %9 = arith.addf %6, %8 : vector<512x128xf32>
    %cst = arith.constant 4.000000e+00 : f32
    %10 = vector.broadcast %cst : f32 to vector<512x128xf32>
    %11 = arith.divf %9, %10 : vector<512x128xf32>
    %c0_6 = arith.constant 0 : index
    %c0_7 = arith.constant 0 : index
    %12 = vector.load %arg5[%c0_6, %c0_7] : memref<512x128xf32, #tpu.memory_space<vmem>>, vector<512x128xf32>
    tpu.vector_store %arg5[%c0_6, %c0_7], %11 {strides = array<i32>} : memref<512x128xf32, #tpu.memory_space<vmem>>, vector<512x128xf32>,
    return
  }
  func.func @transform_0(%arg0: i32) -> (i32, i32) {
    %c0_i32 = arith.constant 0 : i32
    %c0_i32_0 = arith.constant 0 : i32
    return %arg0, %c0_i32 : i32, i32
  }
  func.func @transform_1(%arg0: i32) -> (i32, i32) {
    %c0_i32 = arith.constant 0 : i32
    %c0_i32_0 = arith.constant 0 : i32
    return %arg0, %c0_i32 : i32, i32
  }
  func.func @transform_2(%arg0: i32) -> (i32, i32) {
    %c0_i32 = arith.constant 0 : i32
    %c0_i32_0 = arith.constant 0 : i32
    %c0_i32_1 = arith.constant 0 : i32
    return %c0_i32, %c0_i32_0 : i32, i32
  }
  func.func @transform_3(%arg0: i32) -> i32 {
    %c0_i32 = arith.constant 0 : i32
    %c0_i32_0 = arith.constant 0 : i32
    return %c0_i32 : i32
  }
  func.func @transform_4(%arg0: i32) -> (i32, i32) {
    %c0_i32 = arith.constant 0 : i32
    %c0_i32_0 = arith.constant 0 : i32
    return %arg0, %c0_i32 : i32, i32
  }
}

</mosaic_0001>

<llo_original>
// kernel: tpu_custom_call.1
$region0: #{tpu_custom_call.1}
  #allocation0 [shape = 'u32[]', space=smem, size = 0x4, offset = 0x4, fixed_abs, tag = 'smem constant byte address 0x4 - core index']
  #allocation1 [shape = 'u32[144,128]{1,0:T(1,128)}', space=vmem, size = 0x12000, scoped, tag = 'internal scratch']
  #allocation2 [shape = 'f32[1]{0:T(128)S(6)}', space=smem, size = 0x200, scoped, tag = 'scoped memory for tpu_custom_call.1']
  %s0 = inlined_call_operand.vmem [shape: f32[512,128], index: 0, kind: input, shape index: {}]
  %s1 = inlined_call_operand.vmem [shape: f32[512,1], index: 1, kind: input, shape index: {}]
  %s2 = inlined_call_operand.vmem [shape: f32[1,128], index: 2, kind: input, shape index: {}]
  %s3 = inlined_call_operand.<no memory space> [shape: f32[1], index: 3, kind: input, shape index: {}]
  %s4 = inlined_call_operand.hbm [shape: f32[512,128], index: 4, kind: output, shape index: {}]
  %s5 = sld [smem:[#allocation0]]
  $region26: #{tpu_custom_call.1} parent=0
    _
  %s7 = ssub.s32 1, %s5
  %s8 = scalar_select 0, %s7, %s5
  %9 = sst [smem:[#allocation2]] %s3
  $region1: #{tpu_custom_call.1} parent=0
    #allocation3 [shape = 'u8[262144]{0}', space=vmem, size = 0x40000, scoped, tag = 'output window, operand 0, single buffered']
    #allocation4 [shape = 's32[1]{0}', space=sflag, size = 0x4, scoped, tag = 'scoped memory for tpu_custom_call.1']
    %10 = vsyncpa [#allocation4], 0
    // Predicated region
    $region2: #{tpu_custom_call.1} parent=1 // pred_check
      _
    $region3: #{tpu_custom_call.1} parent=1 // pred_check_branch
      %12 = sbr.rel (0) target = $region5
    $region4: #{tpu_custom_call.1} parent=1 // pred_region
      _
    $region5: #{tpu_custom_call.1} parent=1 // pred_fallthru
      _
    // Predicated region
    $region6: #{tpu_custom_call.1} parent=1 // pred_check
      _
    $region7: #{tpu_custom_call.1} parent=1 // pred_check_branch
      %14 = sbr.rel (0) target = $region9
    $region8: #{tpu_custom_call.1} parent=1 // pred_region
      _
    $region9: #{tpu_custom_call.1} parent=1 // pred_fallthru
      _
    // Predicated region
    $region10: #{tpu_custom_call.1} parent=1 // pred_check
      _
    $region11: #{tpu_custom_call.1} parent=1 // pred_check_branch
      %16 = sbr.rel (0) target = $region13
    $region12: #{tpu_custom_call.1} parent=1 // pred_region
      _
    $region13: #{tpu_custom_call.1} parent=1 // pred_fallthru
      _
    // Predicated region
    $region14: #{tpu_custom_call.1} parent=1 // pred_check
      _
    $region15: #{tpu_custom_call.1} parent=1 // pred_check_branch
      %18 = sbr.rel (0) target = $region17
    $region16: #{tpu_custom_call.1} parent=1 // pred_region
      _
    $region17: #{tpu_custom_call.1} parent=1 // pred_fallthru
      _
    %v19 = vld [vmem:[%s0] sm:$0xff]
    %v20 = vld [vmem:[%s0 + $0x8] sm:$0xff]
    %v21 = vld [vmem:[%s0 + $0x10] sm:$0xff]
    %v22 = vld [vmem:[%s0 + $0x18] sm:$0xff]
    %v23 = vld [vmem:[%s0 + $0x20] sm:$0xff]
    %v24 = vld [vmem:[%s0 + $0x28] sm:$0xff]
    %v25 = vld [vmem:[%s0 + $0x30] sm:$0xff]
    %v26 = vld [vmem:[%s0 + $0x38] sm:$0xff]
    %v27 = vld [vmem:[%s0 + $0x40] sm:$0xff]
    %v28 = vld [vmem:[%s0 + $0x48] sm:$0xff]
    %v29 = vld [vmem:[%s0 + $0x50] sm:$0xff]
    %v30 = vld [vmem:[%s0 + $0x58] sm:$0xff]
    %v31 = vld [vmem:[%s0 + $0x60] sm:$0xff]
    %v32 = vld [vmem:[%s0 + $0x68] sm:$0xff]
    %v33 = vld [vmem:[%s0 + $0x70] sm:$0xff]
    %v34 = vld [vmem:[%s0 + $0x78] sm:$0xff]
    %v35 = vld [vmem:[%s0 + $0x80] sm:$0xff]
    %v36 = vld [vmem:[%s0 + $0x88] sm:$0xff]
    %v37 = vld [vmem:[%s0 + $0x90] sm:$0xff]
    %v38 = vld [vmem:[%s0 + $0x98] sm:$0xff]
    %v39 = vld [vmem:[%s0 + $0xa0] sm:$0xff]
    %v40 = vld [vmem:[%s0 + $0xa8] sm:$0xff]
    %v41 = vld [vmem:[%s0 + $0xb0] sm:$0xff]
    %v42 = vld [vmem:[%s0 + $0xb8] sm:$0xff]
    %v43 = vld [vmem:[%s0 + $0xc0] sm:$0xff]
    %v44 = vld [vmem:[%s0 + $0xc8] sm:$0xff]
    %v45 = vld [vmem:[%s0 + $0xd0] sm:$0xff]
    %v46 = vld [vmem:[%s0 + $0xd8] sm:$0xff]
    %v47 = vld [vmem:[%s0 + $0xe0] sm:$0xff]
    %v48 = vld [vmem:[%s0 + $0xe8] sm:$0xff]
    %v49 = vld [vmem:[%s0 + $0xf0] sm:$0xff]
    %v50 = vld [vmem:[%s0 + $0xf8] sm:$0xff]
    %v51 = vld [vmem:[%s0 + $0x100] sm:$0xff]
    %v52 = vld [vmem:[%s0 + $0x108] sm:$0xff]
    %v53 = vld [vmem:[%s0 + $0x110] sm:$0xff]
    %v54 = vld [vmem:[%s0 + $0x118] sm:$0xff]
    %v55 = vld [vmem:[%s0 + $0x120] sm:$0xff]
    %v56 = vld [vmem:[%s0 + $0x128] sm:$0xff]
    %v57 = vld [vmem:[%s0 + $0x130] sm:$0xff]
    %v58 = vld [vmem:[%s0 + $0x138] sm:$0xff]
    %v59 = vld [vmem:[%s0 + $0x140] sm:$0xff]
    %v60 = vld [vmem:[%s0 + $0x148] sm:$0xff]
    %v61 = vld [vmem:[%s0 + $0x150] sm:$0xff]
    %v62 = vld [vmem:[%s0 + $0x158] sm:$0xff]
    %v63 = vld [vmem:[%s0 + $0x160] sm:$0xff]
    %v64 = vld [vmem:[%s0 + $0x168] sm:$0xff]
    %v65 = vld [vmem:[%s0 + $0x170] sm:$0xff]
    %v66 = vld [vmem:[%s0 + $0x178] sm:$0xff]
    %v67 = vld [vmem:[%s0 + $0x180] sm:$0xff]
    %v68 = vld [vmem:[%s0 + $0x188] sm:$0xff]
    %v69 = vld [vmem:[%s0 + $0x190] sm:$0xff]
    %v70 = vld [vmem:[%s0 + $0x198] sm:$0xff]
    %v71 = vld [vmem:[%s0 + $0x1a0] sm:$0xff]
    %v72 = vld [vmem:[%s0 + $0x1a8] sm:$0xff]
    %v73 = vld [vmem:[%s0 + $0x1b0] sm:$0xff]
    %v74 = vld [vmem:[%s0 + $0x1b8] sm:$0xff]
    %v75 = vld [vmem:[%s0 + $0x1c0] sm:$0xff]
    %v76 = vld [vmem:[%s0 + $0x1c8] sm:$0xff]
    %v77 = vld [vmem:[%s0 + $0x1d0] sm:$0xff]
    %v78 = vld [vmem:[%s0 + $0x1d8] sm:$0xff]
    %v79 = vld [vmem:[%s0 + $0x1e0] sm:$0xff]
    %v80 = vld [vmem:[%s0 + $0x1e8] sm:$0xff]
    %v81 = vld [vmem:[%s0 + $0x1f0] sm:$0xff]
    %v82 = vld [vmem:[%s0 + $0x1f8] sm:$0xff]
    %v83 = vld [vmem:[%s1] sm:$0xff]
    %v84 = vld [vmem:[%s1 + $0x8] sm:$0xff]
    %v85 = vld [vmem:[%s1 + $0x10] sm:$0xff]
    %v86 = vld [vmem:[%s1 + $0x18] sm:$0xff]
    %v87 = vld [vmem:[%s1 + $0x20] sm:$0xff]
    %v88 = vld [vmem:[%s1 + $0x28] sm:$0xff]
    %v89 = vld [vmem:[%s1 + $0x30] sm:$0xff]
    %v90 = vld [vmem:[%s1 + $0x38] sm:$0xff]
    %v91 = vld [vmem:[%s1 + $0x40] sm:$0xff]
    %v92 = vld [vmem:[%s1 + $0x48] sm:$0xff]
    %v93 = vld [vmem:[%s1 + $0x50] sm:$0xff]
    %v94 = vld [vmem:[%s1 + $0x58] sm:$0xff]
    %v95 = vld [vmem:[%s1 + $0x60] sm:$0xff]
    %v96 = vld [vmem:[%s1 + $0x68] sm:$0xff]
    %v97 = vld [vmem:[%s1 + $0x70] sm:$0xff]
    %v98 = vld [vmem:[%s1 + $0x78] sm:$0xff]
    %v99 = vld [vmem:[%s1 + $0x80] sm:$0xff]
    %v100 = vld [vmem:[%s1 + $0x88] sm:$0xff]
    %v101 = vld [vmem:[%s1 + $0x90] sm:$0xff]
    %v102 = vld [vmem:[%s1 + $0x98] sm:$0xff]
    %v103 = vld [vmem:[%s1 + $0xa0] sm:$0xff]
    %v104 = vld [vmem:[%s1 + $0xa8] sm:$0xff]
    %v105 = vld [vmem:[%s1 + $0xb0] sm:$0xff]
    %v106 = vld [vmem:[%s1 + $0xb8] sm:$0xff]
    %v107 = vld [vmem:[%s1 + $0xc0] sm:$0xff]
    %v108 = vld [vmem:[%s1 + $0xc8] sm:$0xff]
    %v109 = vld [vmem:[%s1 + $0xd0] sm:$0xff]
    %v110 = vld [vmem:[%s1 + $0xd8] sm:$0xff]
    %v111 = vld [vmem:[%s1 + $0xe0] sm:$0xff]
    %v112 = vld [vmem:[%s1 + $0xe8] sm:$0xff]
    %v113 = vld [vmem:[%s1 + $0xf0] sm:$0xff]
    %v114 = vld [vmem:[%s1 + $0xf8] sm:$0xff]
    %v115 = vld [vmem:[%s1 + $0x100] sm:$0xff]
    %v116 = vld [vmem:[%s1 + $0x108] sm:$0xff]
    %v117 = vld [vmem:[%s1 + $0x110] sm:$0xff]
    %v118 = vld [vmem:[%s1 + $0x118] sm:$0xff]
    %v119 = vld [vmem:[%s1 + $0x120] sm:$0xff]
    %v120 = vld [vmem:[%s1 + $0x128] sm:$0xff]
    %v121 = vld [vmem:[%s1 + $0x130] sm:$0xff]
    %v122 = vld [vmem:[%s1 + $0x138] sm:$0xff]
    %v123 = vld [vmem:[%s1 + $0x140] sm:$0xff]
    %v124 = vld [vmem:[%s1 + $0x148] sm:$0xff]
    %v125 = vld [vmem:[%s1 + $0x150] sm:$0xff]
    %v126 = vld [vmem:[%s1 + $0x158] sm:$0xff]
    %v127 = vld [vmem:[%s1 + $0x160] sm:$0xff]
    %v128 = vld [vmem:[%s1 + $0x168] sm:$0xff]
    %v129 = vld [vmem:[%s1 + $0x170] sm:$0xff]
    %v130 = vld [vmem:[%s1 + $0x178] sm:$0xff]
    %v131 = vld [vmem:[%s1 + $0x180] sm:$0xff]
    %v132 = vld [vmem:[%s1 + $0x188] sm:$0xff]
    %v133 = vld [vmem:[%s1 + $0x190] sm:$0xff]
    %v134 = vld [vmem:[%s1 + $0x198] sm:$0xff]
    %v135 = vld [vmem:[%s1 + $0x1a0] sm:$0xff]
    %v136 = vld [vmem:[%s1 + $0x1a8] sm:$0xff]
    %v137 = vld [vmem:[%s1 + $0x1b0] sm:$0xff]
    %v138 = vld [vmem:[%s1 + $0x1b8] sm:$0xff]
    %v139 = vld [vmem:[%s1 + $0x1c0] sm:$0xff]
    %v140 = vld [vmem:[%s1 + $0x1c8] sm:$0xff]
    %v141 = vld [vmem:[%s1 + $0x1d0] sm:$0xff]
    %v142 = vld [vmem:[%s1 + $0x1d8] sm:$0xff]
    %v143 = vld [vmem:[%s1 + $0x1e0] sm:$0xff]
    %v144 = vld [vmem:[%s1 + $0x1e8] sm:$0xff]
    %v145 = vld [vmem:[%s1 + $0x1f0] sm:$0xff]
    %v146 = vld [vmem:[%s1 + $0x1f8] sm:$0xff]
    %148 = vset.pattern.permute.xlu0 0
    %149 = vperm.xlu0 %148, %v83
    %v150 = vpop.permute.xlu0 %149
    %153 = vset.pattern.permute.xlu0 0
    %154 = vperm.xlu0 %153, %v84
    %v155 = vpop.permute.xlu0 %154
    %158 = vset.pattern.permute.xlu0 0
    %159 = vperm.xlu0 %158, %v85
    %v160 = vpop.permute.xlu0 %159
    %163 = vset.pattern.permute.xlu0 0
    %164 = vperm.xlu0 %163, %v86
    %v165 = vpop.permute.xlu0 %164
    %168 = vset.pattern.permute.xlu0 0
    %169 = vperm.xlu0 %168, %v87
    %v170 = vpop.permute.xlu0 %169
    %173 = vset.pattern.permute.xlu0 0
    %174 = vperm.xlu0 %173, %v88
    %v175 = vpop.permute.xlu0 %174
    %178 = vset.pattern.permute.xlu0 0
    %179 = vperm.xlu0 %178, %v89
    %v180 = vpop.permute.xlu0 %179
    %183 = vset.pattern.permute.xlu0 0
    %184 = vperm.xlu0 %183, %v90
    %v185 = vpop.permute.xlu0 %184
    %188 = vset.pattern.permute.xlu0 0
    %189 = vperm.xlu0 %188, %v91
    %v190 = vpop.permute.xlu0 %189
    %193 = vset.pattern.permute.xlu0 0
    %194 = vperm.xlu0 %193, %v92
    %v195 = vpop.permute.xlu0 %194
    %198 = vset.pattern.permute.xlu0 0
    %199 = vperm.xlu0 %198, %v93
    %v200 = vpop.permute.xlu0 %199
    %203 = vset.pattern.permute.xlu0 0
    %204 = vperm.xlu0 %203, %v94
    %v205 = vpop.permute.xlu0 %204
    %208 = vset.pattern.permute.xlu0 0
    %209 = vperm.xlu0 %208, %v95
    %v210 = vpop.permute.xlu0 %209
    %213 = vset.pattern.permute.xlu0 0
    %214 = vperm.xlu0 %213, %v96
    %v215 = vpop.permute.xlu0 %214
    %218 = vset.pattern.permute.xlu0 0
    %219 = vperm.xlu0 %218, %v97
    %v220 = vpop.permute.xlu0 %219
    %223 = vset.pattern.permute.xlu0 0
    %224 = vperm.xlu0 %223, %v98
    %v225 = vpop.permute.xlu0 %224
    %228 = vset.pattern.permute.xlu0 0
    %229 = vperm.xlu0 %228, %v99
    %v230 = vpop.permute.xlu0 %229
    %233 = vset.pattern.permute.xlu0 0
    %234 = vperm.xlu0 %233, %v100
    %v235 = vpop.permute.xlu0 %234
    %238 = vset.pattern.permute.xlu0 0
    %239 = vperm.xlu0 %238, %v101
    %v240 = vpop.permute.xlu0 %239
    %243 = vset.pattern.permute.xlu0 0
    %244 = vperm.xlu0 %243, %v102
    %v245 = vpop.permute.xlu0 %244
    %248 = vset.pattern.permute.xlu0 0
    %249 = vperm.xlu0 %248, %v103
    %v250 = vpop.permute.xlu0 %249
    %253 = vset.pattern.permute.xlu0 0
    %254 = vperm.xlu0 %253, %v104
    %v255 = vpop.permute.xlu0 %254
    %258 = vset.pattern.permute.xlu0 0
    %259 = vperm.xlu0 %258, %v105
    %v260 = vpop.permute.xlu0 %259
    %263 = vset.pattern.permute.xlu0 0
    %264 = vperm.xlu0 %263, %v106
    %v265 = vpop.permute.xlu0 %264
    %268 = vset.pattern.permute.xlu0 0
    %269 = vperm.xlu0 %268, %v107
    %v270 = vpop.permute.xlu0 %269
    %273 = vset.pattern.permute.xlu0 0
    %274 = vperm.xlu0 %273, %v108
    %v275 = vpop.permute.xlu0 %274
    %278 = vset.pattern.permute.xlu0 0
    %279 = vperm.xlu0 %278, %v109
    %v280 = vpop.permute.xlu0 %279
    %283 = vset.pattern.permute.xlu0 0
    %284 = vperm.xlu0 %283, %v110
    %v285 = vpop.permute.xlu0 %284
    %288 = vset.pattern.permute.xlu0 0
    %289 = vperm.xlu0 %288, %v111
    %v290 = vpop.permute.xlu0 %289
    %293 = vset.pattern.permute.xlu0 0
    %294 = vperm.xlu0 %293, %v112
    %v295 = vpop.permute.xlu0 %294
    %298 = vset.pattern.permute.xlu0 0
    %299 = vperm.xlu0 %298, %v113
    %v300 = vpop.permute.xlu0 %299
    %303 = vset.pattern.permute.xlu0 0
    %304 = vperm.xlu0 %303, %v114
    %v305 = vpop.permute.xlu0 %304
    %308 = vset.pattern.permute.xlu0 0
    %309 = vperm.xlu0 %308, %v115
    %v310 = vpop.permute.xlu0 %309
    %313 = vset.pattern.permute.xlu0 0
    %314 = vperm.xlu0 %313, %v116
    %v315 = vpop.permute.xlu0 %314
    %318 = vset.pattern.permute.xlu0 0
    %319 = vperm.xlu0 %318, %v117
    %v320 = vpop.permute.xlu0 %319
    %323 = vset.pattern.permute.xlu0 0
    %324 = vperm.xlu0 %323, %v118
    %v325 = vpop.permute.xlu0 %324
    %328 = vset.pattern.permute.xlu0 0
    %329 = vperm.xlu0 %328, %v119
    %v330 = vpop.permute.xlu0 %329
    %333 = vset.pattern.permute.xlu0 0
    %334 = vperm.xlu0 %333, %v120
    %v335 = vpop.permute.xlu0 %334
    %338 = vset.pattern.permute.xlu0 0
    %339 = vperm.xlu0 %338, %v121
    %v340 = vpop.permute.xlu0 %339
    %343 = vset.pattern.permute.xlu0 0
    %344 = vperm.xlu0 %343, %v122
    %v345 = vpop.permute.xlu0 %344
    %348 = vset.pattern.permute.xlu0 0
    %349 = vperm.xlu0 %348, %v123
    %v350 = vpop.permute.xlu0 %349
    %353 = vset.pattern.permute.xlu0 0
    %354 = vperm.xlu0 %353, %v124
    %v355 = vpop.permute.xlu0 %354
    %358 = vset.pattern.permute.xlu0 0
    %359 = vperm.xlu0 %358, %v125
    %v360 = vpop.permute.xlu0 %359
    %363 = vset.pattern.permute.xlu0 0
    %364 = vperm.xlu0 %363, %v126
    %v365 = vpop.permute.xlu0 %364
    %368 = vset.pattern.permute.xlu0 0
    %369 = vperm.xlu0 %368, %v127
    %v370 = vpop.permute.xlu0 %369
    %373 = vset.pattern.permute.xlu0 0
    %374 = vperm.xlu0 %373, %v128
    %v375 = vpop.permute.xlu0 %374
    %378 = vset.pattern.permute.xlu0 0
    %379 = vperm.xlu0 %378, %v129
    %v380 = vpop.permute.xlu0 %379
    %383 = vset.pattern.permute.xlu0 0
    %384 = vperm.xlu0 %383, %v130
    %v385 = vpop.permute.xlu0 %384
    %388 = vset.pattern.permute.xlu0 0
    %389 = vperm.xlu0 %388, %v131
    %v390 = vpop.permute.xlu0 %389
    %393 = vset.pattern.permute.xlu0 0
    %394 = vperm.xlu0 %393, %v132
    %v395 = vpop.permute.xlu0 %394
    %398 = vset.pattern.permute.xlu0 0
    %399 = vperm.xlu0 %398, %v133
    %v400 = vpop.permute.xlu0 %399
    %403 = vset.pattern.permute.xlu0 0
    %404 = vperm.xlu0 %403, %v134
    %v405 = vpop.permute.xlu0 %404
    %408 = vset.pattern.permute.xlu0 0
    %409 = vperm.xlu0 %408, %v135
    %v410 = vpop.permute.xlu0 %409
    %413 = vset.pattern.permute.xlu0 0
    %414 = vperm.xlu0 %413, %v136
    %v415 = vpop.permute.xlu0 %414
    %418 = vset.pattern.permute.xlu0 0
    %419 = vperm.xlu0 %418, %v137
    %v420 = vpop.permute.xlu0 %419
    %423 = vset.pattern.permute.xlu0 0
    %424 = vperm.xlu0 %423, %v138
    %v425 = vpop.permute.xlu0 %424
    %428 = vset.pattern.permute.xlu0 0
    %429 = vperm.xlu0 %428, %v139
    %v430 = vpop.permute.xlu0 %429
    %433 = vset.pattern.permute.xlu0 0
    %434 = vperm.xlu0 %433, %v140
    %v435 = vpop.permute.xlu0 %434
    %438 = vset.pattern.permute.xlu0 0
    %439 = vperm.xlu0 %438, %v141
    %v440 = vpop.permute.xlu0 %439
    %443 = vset.pattern.permute.xlu0 0
    %444 = vperm.xlu0 %443, %v142
    %v445 = vpop.permute.xlu0 %444
    %448 = vset.pattern.permute.xlu0 0
    %449 = vperm.xlu0 %448, %v143
    %v450 = vpop.permute.xlu0 %449
    %453 = vset.pattern.permute.xlu0 0
    %454 = vperm.xlu0 %453, %v144
    %v455 = vpop.permute.xlu0 %454
    %458 = vset.pattern.permute.xlu0 0
    %459 = vperm.xlu0 %458, %v145
    %v460 = vpop.permute.xlu0 %459
    %463 = vset.pattern.permute.xlu0 0
    %464 = vperm.xlu0 %463, %v146
    %v465 = vpop.permute.xlu0 %464
    %v467 = vadd.f32 %v19, %v150
    %v468 = vadd.f32 %v20, %v155
    %v469 = vadd.f32 %v21, %v160
    %v470 = vadd.f32 %v22, %v165
    %v471 = vadd.f32 %v23, %v170
    %v472 = vadd.f32 %v24, %v175
    %v473 = vadd.f32 %v25, %v180
    %v474 = vadd.f32 %v26, %v185
    %v475 = vadd.f32 %v27, %v190
    %v476 = vadd.f32 %v28, %v195
    %v477 = vadd.f32 %v29, %v200
    %v478 = vadd.f32 %v30, %v205
    %v479 = vadd.f32 %v31, %v210
    %v480 = vadd.f32 %v32, %v215
    %v481 = vadd.f32 %v33, %v220
    %v482 = vadd.f32 %v34, %v225
    %v483 = vadd.f32 %v35, %v230
    %v484 = vadd.f32 %v36, %v235
    %v485 = vadd.f32 %v37, %v240
    %v486 = vadd.f32 %v38, %v245
    %v487 = vadd.f32 %v39, %v250
    %v488 = vadd.f32 %v40, %v255
    %v489 = vadd.f32 %v41, %v260
    %v490 = vadd.f32 %v42, %v265
    %v491 = vadd.f32 %v43, %v270
    %v492 = vadd.f32 %v44, %v275
    %v493 = vadd.f32 %v45, %v280
    %v494 = vadd.f32 %v46, %v285
    %v495 = vadd.f32 %v47, %v290
    %v496 = vadd.f32 %v48, %v295
    %v497 = vadd.f32 %v49, %v300
    %v498 = vadd.f32 %v50, %v305
    %v499 = vadd.f32 %v51, %v310
    %v500 = vadd.f32 %v52, %v315
    %v501 = vadd.f32 %v53, %v320
    %v502 = vadd.f32 %v54, %v325
    %v503 = vadd.f32 %v55, %v330
    %v504 = vadd.f32 %v56, %v335
    %v505 = vadd.f32 %v57, %v340
    %v506 = vadd.f32 %v58, %v345
    %v507 = vadd.f32 %v59, %v350
    %v508 = vadd.f32 %v60, %v355
    %v509 = vadd.f32 %v61, %v360
    %v510 = vadd.f32 %v62, %v365
    %v511 = vadd.f32 %v63, %v370
    %v512 = vadd.f32 %v64, %v375
    %v513 = vadd.f32 %v65, %v380
    %v514 = vadd.f32 %v66, %v385
    %v515 = vadd.f32 %v67, %v390
    %v516 = vadd.f32 %v68, %v395
    %v517 = vadd.f32 %v69, %v400
    %v518 = vadd.f32 %v70, %v405
    %v519 = vadd.f32 %v71, %v410
    %v520 = vadd.f32 %v72, %v415
    %v521 = vadd.f32 %v73, %v420
    %v522 = vadd.f32 %v74, %v425
    %v523 = vadd.f32 %v75, %v430
    %v524 = vadd.f32 %v76, %v435
    %v525 = vadd.f32 %v77, %v440
    %v526 = vadd.f32 %v78, %v445
    %v527 = vadd.f32 %v79, %v450
    %v528 = vadd.f32 %v80, %v455
    %v529 = vadd.f32 %v81, %v460
    %v530 = vadd.f32 %v82, %v465
    %v531 = vld [vmem:[%s2] sm:$0x1]
    %v533 = vlaneseq
    %v534 = vshrl.u32 %v533, 7
    %v535 = vsub.s32 0, %v534
    %v536 = vrot.slane %v531, %v535
    %v538 = vadd.f32 %v467, %v536
    %v539 = vadd.f32 %v468, %v536
    %v540 = vadd.f32 %v469, %v536
    %v541 = vadd.f32 %v470, %v536
    %v542 = vadd.f32 %v471, %v536
    %v543 = vadd.f32 %v472, %v536
    %v544 = vadd.f32 %v473, %v536
    %v545 = vadd.f32 %v474, %v536
    %v546 = vadd.f32 %v475, %v536
    %v547 = vadd.f32 %v476, %v536
    %v548 = vadd.f32 %v477, %v536
    %v549 = vadd.f32 %v478, %v536
    %v550 = vadd.f32 %v479, %v536
    %v551 = vadd.f32 %v480, %v536
    %v552 = vadd.f32 %v481, %v536
    %v553 = vadd.f32 %v482, %v536
    %v554 = vadd.f32 %v483, %v536
    %v555 = vadd.f32 %v484, %v536
    %v556 = vadd.f32 %v485, %v536
    %v557 = vadd.f32 %v486, %v536
    %v558 = vadd.f32 %v487, %v536
    %v559 = vadd.f32 %v488, %v536
    %v560 = vadd.f32 %v489, %v536
    %v561 = vadd.f32 %v490, %v536
    %v562 = vadd.f32 %v491, %v536
    %v563 = vadd.f32 %v492, %v536
    %v564 = vadd.f32 %v493, %v536
    %v565 = vadd.f32 %v494, %v536
    %v566 = vadd.f32 %v495, %v536
    %v567 = vadd.f32 %v496, %v536
    %v568 = vadd.f32 %v497, %v536
    %v569 = vadd.f32 %v498, %v536
    %v570 = vadd.f32 %v499, %v536
    %v571 = vadd.f32 %v500, %v536
    %v572 = vadd.f32 %v501, %v536
    %v573 = vadd.f32 %v502, %v536
    %v574 = vadd.f32 %v503, %v536
    %v575 = vadd.f32 %v504, %v536
    %v576 = vadd.f32 %v505, %v536
    %v577 = vadd.f32 %v506, %v536
    %v578 = vadd.f32 %v507, %v536
    %v579 = vadd.f32 %v508, %v536
    %v580 = vadd.f32 %v509, %v536
    %v581 = vadd.f32 %v510, %v536
    %v582 = vadd.f32 %v511, %v536
    %v583 = vadd.f32 %v512, %v536
    %v584 = vadd.f32 %v513, %v536
    %v585 = vadd.f32 %v514, %v536
    %v586 = vadd.f32 %v515, %v536
    %v587 = vadd.f32 %v516, %v536
    %v588 = vadd.f32 %v517, %v536
    %v589 = vadd.f32 %v518, %v536
    %v590 = vadd.f32 %v519, %v536
    %v591 = vadd.f32 %v520, %v536
    %v592 = vadd.f32 %v521, %v536
    %v593 = vadd.f32 %v522, %v536
    %v594 = vadd.f32 %v523, %v536
    %v595 = vadd.f32 %v524, %v536
    %v596 = vadd.f32 %v525, %v536
    %v597 = vadd.f32 %v526, %v536
    %v598 = vadd.f32 %v527, %v536
    %v599 = vadd.f32 %v528, %v536
    %v600 = vadd.f32 %v529, %v536
    %v601 = vadd.f32 %v530, %v536
    %s602 = sld [smem:[#allocation2]]
    %v603 = vstv %s602
    %v604 = vadd.f32 %v538, %v603
    %v605 = vadd.f32 %v539, %v603
    %v606 = vadd.f32 %v540, %v603
    %v607 = vadd.f32 %v541, %v603
    %v608 = vadd.f32 %v542, %v603
    %v609 = vadd.f32 %v543, %v603
    %v610 = vadd.f32 %v544, %v603
    %v611 = vadd.f32 %v545, %v603
    %v612 = vadd.f32 %v546, %v603
    %v613 = vadd.f32 %v547, %v603
    %v614 = vadd.f32 %v548, %v603
    %v615 = vadd.f32 %v549, %v603
    %v616 = vadd.f32 %v550, %v603
    %v617 = vadd.f32 %v551, %v603
    %v618 = vadd.f32 %v552, %v603
    %v619 = vadd.f32 %v553, %v603
    %v620 = vadd.f32 %v554, %v603
    %v621 = vadd.f32 %v555, %v603
    %v622 = vadd.f32 %v556, %v603
    %v623 = vadd.f32 %v557, %v603
    %v624 = vadd.f32 %v558, %v603
    %v625 = vadd.f32 %v559, %v603
    %v626 = vadd.f32 %v560, %v603
    %v627 = vadd.f32 %v561, %v603
    %v628 = vadd.f32 %v562, %v603
    %v629 = vadd.f32 %v563, %v603
    %v630 = vadd.f32 %v564, %v603
    %v631 = vadd.f32 %v565, %v603
    %v632 = vadd.f32 %v566, %v603
    %v633 = vadd.f32 %v567, %v603
    %v634 = vadd.f32 %v568, %v603
    %v635 = vadd.f32 %v569, %v603
    %v636 = vadd.f32 %v570, %v603
    %v637 = vadd.f32 %v571, %v603
    %v638 = vadd.f32 %v572, %v603
    %v639 = vadd.f32 %v573, %v603
    %v640 = vadd.f32 %v574, %v603
    %v641 = vadd.f32 %v575, %v603
    %v642 = vadd.f32 %v576, %v603
    %v643 = vadd.f32 %v577, %v603
    %v644 = vadd.f32 %v578, %v603
    %v645 = vadd.f32 %v579, %v603
    %v646 = vadd.f32 %v580, %v603
    %v647 = vadd.f32 %v581, %v603
    %v648 = vadd.f32 %v582, %v603
    %v649 = vadd.f32 %v583, %v603
    %v650 = vadd.f32 %v584, %v603
    %v651 = vadd.f32 %v585, %v603
    %v652 = vadd.f32 %v586, %v603
    %v653 = vadd.f32 %v587, %v603
    %v654 = vadd.f32 %v588, %v603
    %v655 = vadd.f32 %v589, %v603
    %v656 = vadd.f32 %v590, %v603
    %v657 = vadd.f32 %v591, %v603
    %v658 = vadd.f32 %v592, %v603
    %v659 = vadd.f32 %v593, %v603
    %v660 = vadd.f32 %v594, %v603
    %v661 = vadd.f32 %v595, %v603
    %v662 = vadd.f32 %v596, %v603
    %v663 = vadd.f32 %v597, %v603
    %v664 = vadd.f32 %v598, %v603
    %v665 = vadd.f32 %v599, %v603
    %v666 = vadd.f32 %v600, %v603
    %v667 = vadd.f32 %v601, %v603
    %v668 = vrcp.pop 4.0
    %v669 = vmul.f32 %v604, %v668
    %v670 = vmul.f32 %v605, %v668
    %v671 = vmul.f32 %v606, %v668
    %v672 = vmul.f32 %v607, %v668
    %v673 = vmul.f32 %v608, %v668
    %v674 = vmul.f32 %v609, %v668
    %v675 = vmul.f32 %v610, %v668
    %v676 = vmul.f32 %v611, %v668
    %v677 = vmul.f32 %v612, %v668
    %v678 = vmul.f32 %v613, %v668
    %v679 = vmul.f32 %v614, %v668
    %v680 = vmul.f32 %v615, %v668
    %v681 = vmul.f32 %v616, %v668
    %v682 = vmul.f32 %v617, %v668
    %v683 = vmul.f32 %v618, %v668
    %v684 = vmul.f32 %v619, %v668
    %v685 = vmul.f32 %v620, %v668
    %v686 = vmul.f32 %v621, %v668
    %v687 = vmul.f32 %v622, %v668
    %v688 = vmul.f32 %v623, %v668
    %v689 = vmul.f32 %v624, %v668
    %v690 = vmul.f32 %v625, %v668
    %v691 = vmul.f32 %v626, %v668
    %v692 = vmul.f32 %v627, %v668
    %v693 = vmul.f32 %v628, %v668
    %v694 = vmul.f32 %v629, %v668
    %v695 = vmul.f32 %v630, %v668
    %v696 = vmul.f32 %v631, %v668
    %v697 = vmul.f32 %v632, %v668
    %v698 = vmul.f32 %v633, %v668
    %v699 = vmul.f32 %v634, %v668
    %v700 = vmul.f32 %v635, %v668
    %v701 = vmul.f32 %v636, %v668
    %v702 = vmul.f32 %v637, %v668
    %v703 = vmul.f32 %v638, %v668
    %v704 = vmul.f32 %v639, %v668
    %v705 = vmul.f32 %v640, %v668
    %v706 = vmul.f32 %v641, %v668
    %v707 = vmul.f32 %v642, %v668
    %v708 = vmul.f32 %v643, %v668
    %v709 = vmul.f32 %v644, %v668
    %v710 = vmul.f32 %v645, %v668
    %v711 = vmul.f32 %v646, %v668
    %v712 = vmul.f32 %v647, %v668
    %v713 = vmul.f32 %v648, %v668
    %v714 = vmul.f32 %v649, %v668
    %v715 = vmul.f32 %v650, %v668
    %v716 = vmul.f32 %v651, %v668
    %v717 = vmul.f32 %v652, %v668
    %v718 = vmul.f32 %v653, %v668
    %v719 = vmul.f32 %v654, %v668
    %v720 = vmul.f32 %v655, %v668
    %v721 = vmul.f32 %v656, %v668
    %v722 = vmul.f32 %v657, %v668
    %v723 = vmul.f32 %v658, %v668
    %v724 = vmul.f32 %v659, %v668
    %v725 = vmul.f32 %v660, %v668
    %v726 = vmul.f32 %v661, %v668
    %v727 = vmul.f32 %v662, %v668
    %v728 = vmul.f32 %v663, %v668
    %v729 = vmul.f32 %v664, %v668
    %v730 = vmul.f32 %v665, %v668
    %v731 = vmul.f32 %v666, %v668
    %v732 = vmul.f32 %v667, %v668
    %733 = vst [vmem:[#allocation3] sm:$0xff] %v669
    %734 = vst [vmem:[#allocation3 + $0x8] sm:$0xff] %v670
    %735 = vst [vmem:[#allocation3 + $0x10] sm:$0xff] %v671
    %736 = vst [vmem:[#allocation3 + $0x18] sm:$0xff] %v672
    %737 = vst [vmem:[#allocation3 + $0x20] sm:$0xff] %v673
    %738 = vst [vmem:[#allocation3 + $0x28] sm:$0xff] %v674
    %739 = vst [vmem:[#allocation3 + $0x30] sm:$0xff] %v675
    %740 = vst [vmem:[#allocation3 + $0x38] sm:$0xff] %v676
    %741 = vst [vmem:[#allocation3 + $0x40] sm:$0xff] %v677
    %742 = vst [vmem:[#allocation3 + $0x48] sm:$0xff] %v678
    %743 = vst [vmem:[#allocation3 + $0x50] sm:$0xff] %v679
    %744 = vst [vmem:[#allocation3 + $0x58] sm:$0xff] %v680
    %745 = vst [vmem:[#allocation3 + $0x60] sm:$0xff] %v681
    %746 = vst [vmem:[#allocation3 + $0x68] sm:$0xff] %v682
    %747 = vst [vmem:[#allocation3 + $0x70] sm:$0xff] %v683
    %748 = vst [vmem:[#allocation3 + $0x78] sm:$0xff] %v684
    %749 = vst [vmem:[#allocation3 + $0x80] sm:$0xff] %v685
    %750 = vst [vmem:[#allocation3 + $0x88] sm:$0xff] %v686
    %751 = vst [vmem:[#allocation3 + $0x90] sm:$0xff] %v687
    %752 = vst [vmem:[#allocation3 + $0x98] sm:$0xff] %v688
    %753 = vst [vmem:[#allocation3 + $0xa0] sm:$0xff] %v689
    %754 = vst [vmem:[#allocation3 + $0xa8] sm:$0xff] %v690
    %755 = vst [vmem:[#allocation3 + $0xb0] sm:$0xff] %v691
    %756 = vst [vmem:[#allocation3 + $0xb8] sm:$0xff] %v692
    %757 = vst [vmem:[#allocation3 + $0xc0] sm:$0xff] %v693
    %758 = vst [vmem:[#allocation3 + $0xc8] sm:$0xff] %v694
    %759 = vst [vmem:[#allocation3 + $0xd0] sm:$0xff] %v695
    %760 = vst [vmem:[#allocation3 + $0xd8] sm:$0xff] %v696
    %761 = vst [vmem:[#allocation3 + $0xe0] sm:$0xff] %v697
    %762 = vst [vmem:[#allocation3 + $0xe8] sm:$0xff] %v698
    %763 = vst [vmem:[#allocation3 + $0xf0] sm:$0xff] %v699
    %764 = vst [vmem:[#allocation3 + $0xf8] sm:$0xff] %v700
    %765 = vst [vmem:[#allocation3 + $0x100] sm:$0xff] %v701
    %766 = vst [vmem:[#allocation3 + $0x108] sm:$0xff] %v702
    %767 = vst [vmem:[#allocation3 + $0x110] sm:$0xff] %v703
    %768 = vst [vmem:[#allocation3 + $0x118] sm:$0xff] %v704
    %769 = vst [vmem:[#allocation3 + $0x120] sm:$0xff] %v705
    %770 = vst [vmem:[#allocation3 + $0x128] sm:$0xff] %v706
    %771 = vst [vmem:[#allocation3 + $0x130] sm:$0xff] %v707
    %772 = vst [vmem:[#allocation3 + $0x138] sm:$0xff] %v708
    %773 = vst [vmem:[#allocation3 + $0x140] sm:$0xff] %v709
    %774 = vst [vmem:[#allocation3 + $0x148] sm:$0xff] %v710
    %775 = vst [vmem:[#allocation3 + $0x150] sm:$0xff] %v711
    %776 = vst [vmem:[#allocation3 + $0x158] sm:$0xff] %v712
    %777 = vst [vmem:[#allocation3 + $0x160] sm:$0xff] %v713
    %778 = vst [vmem:[#allocation3 + $0x168] sm:$0xff] %v714
    %779 = vst [vmem:[#allocation3 + $0x170] sm:$0xff] %v715
    %780 = vst [vmem:[#allocation3 + $0x178] sm:$0xff] %v716
    %781 = vst [vmem:[#allocation3 + $0x180] sm:$0xff] %v717
    %782 = vst [vmem:[#allocation3 + $0x188] sm:$0xff] %v718
    %783 = vst [vmem:[#allocation3 + $0x190] sm:$0xff] %v719
    %784 = vst [vmem:[#allocation3 + $0x198] sm:$0xff] %v720
    %785 = vst [vmem:[#allocation3 + $0x1a0] sm:$0xff] %v721
    %786 = vst [vmem:[#allocation3 + $0x1a8] sm:$0xff] %v722
    %787 = vst [vmem:[#allocation3 + $0x1b0] sm:$0xff] %v723
    %788 = vst [vmem:[#allocation3 + $0x1b8] sm:$0xff] %v724
    %789 = vst [vmem:[#allocation3 + $0x1c0] sm:$0xff] %v725
    %790 = vst [vmem:[#allocation3 + $0x1c8] sm:$0xff] %v726
    %791 = vst [vmem:[#allocation3 + $0x1d0] sm:$0xff] %v727
    %792 = vst [vmem:[#allocation3 + $0x1d8] sm:$0xff] %v728
    %793 = vst [vmem:[#allocation3 + $0x1e0] sm:$0xff] %v729
    %794 = vst [vmem:[#allocation3 + $0x1e8] sm:$0xff] %v730
    %795 = vst [vmem:[#allocation3 + $0x1f0] sm:$0xff] %v731
    %796 = vst [vmem:[#allocation3 + $0x1f8] sm:$0xff] %v732
    // Predicated region
    $region18: #{tpu_custom_call.1} parent=1 // pred_check
      _
    $region19: #{tpu_custom_call.1} parent=1 // pred_check_branch
      %798 = sbr.rel (0) target = $region21
    $region20: #{tpu_custom_call.1} parent=1 // pred_region
      %s800 = ssub.s32 8192, 8192
      %801 = vsyncadd [#allocation4], %s800
      %s802 = sshll.u32 [#allocation3], 4
      %s803 = int_to_ptr.vmem [resolvable:$true] %s802
      %808 = dma.vmem_to_hbm [thread:$0]  %s803, 8192, %s4, [#allocation4], 128, 128, 8
    $region21: #{tpu_custom_call.1} parent=1 // pred_fallthru
      _
    // Predicated region
    $region22: #{tpu_custom_call.1} parent=1 // pred_check
      _
    $region23: #{tpu_custom_call.1} parent=1 // pred_check_branch
      %810 = sbr.rel (0) target = $region25
    $region24: #{tpu_custom_call.1} parent=1 // pred_region
      %811 = dma.done [#allocation4], 8192
    $region25: #{tpu_custom_call.1} parent=1 // pred_fallthru
      _
    %812 = vsyncpa [#allocation4], 1

</llo_original>
